<compile_context>
chip_gen: v7x
topology: tpu7x:2x2x1
jax: 0.10.0
libtpu: 0.0.40
codegen_flags: <defaults>
</compile_context>

<pallas_src>
import jax
import jax.numpy as jnp
from jax.experimental import pallas as pl
from jax.experimental.pallas import tpu as pltpu

LEVELS = 4
ALPHA = 0.6
LANE = 128
MAX_TILE_ROWS = 512  # 512x128 f32 = 256 KiB per stream; safe on all generations.


def _level_weights(levels=LEVELS, alpha=ALPHA):
    """Replicates PositionAwareWaveletLoss._calculate_weights (python floats)."""
    ws = []
    for j in range(levels + 1):
        w = 2.0 ** (alpha * j)
        if 0 < j < 3:
            w *= 3.0
        ws.append(w)
    return ws


def _position_weights(j, seq_len):
    """Per-position weights for detail level j (trace-time jnp constants)."""
    pos = jnp.linspace(0.0, 1.0, seq_len, dtype=jnp.float32)
    if j == 0:
        return 1.0 + 4.0 * pos * pos
    if j == 1:
        return 5.0 - 4.0 * pos
    if j == 2:
        return 7.0 - 6.0 * jnp.sqrt(pos)
    return jnp.ones_like(pos)


def _wsse_kernel(p_ref, t_ref, w_ref, out_ref, acc_ref):
    """Weighted SSE over one (tile_rows, 128) tile, accumulated per-lane."""
    i = pl.program_id(0)

    @pl.when(i == 0)
    def _():
        acc_ref[...] = jnp.zeros_like(acc_ref)

    p = p_ref[...].astype(jnp.float32)
    t = t_ref[...].astype(jnp.float32)
    w = w_ref[...]
    d = p - t
    contrib = (d * d) * w                       # pure VPU work per tile
    tr = contrib.shape[0]
    # Fold rows into the (8, 128) per-lane accumulator (vreg-aligned adds only;
    # the cross-lane reduction is deferred to the epilogue).
    acc_ref[...] += jnp.sum(contrib.reshape(tr // 8, 8, LANE), axis=0)

    @pl.when(i == pl.num_programs(0) - 1)
    def _():
        out_ref[0, 0] = jnp.sum(acc_ref[...])   # single XLU reduction, once


def _prepare_slabs(pred_coeffs, target_coeffs, max_tile_rows=MAX_TILE_ROWS):
    """Flatten + concat all levels into lane-dense (rows, 128) slabs plus a
    combined weight slab (level weight * position weight / (B*Sj))."""
    preds = [pred_coeffs['a']] + list(pred_coeffs['d'])
    targs = [target_coeffs['a']] + list(target_coeffs['d'])
    lvl_w = _level_weights()

    p_parts, t_parts, w_parts = [], [], []
    for idx, (p, t) in enumerate(zip(preds, targs)):
        B, S = p.shape
        if idx == 0:
            pw = jnp.ones((S,), jnp.float32)
        else:
            pw = _position_weights(idx - 1, S)
        full_w = (lvl_w[idx] / float(B * S)) * jnp.broadcast_to(pw[None, :], (B, S))
        p_parts.append(p.reshape(-1))
        t_parts.append(t.reshape(-1))
        w_parts.append(full_w.reshape(-1))

    p_flat = jnp.concatenate(p_parts)
    t_flat = jnp.concatenate(t_parts)
    w_flat = jnp.concatenate(w_parts).astype(jnp.float32)

    n = p_flat.shape[0]
    rows = max(8, -(-n // LANE))
    rows = ((rows + 7) // 8) * 8
    grid = -(-rows // max_tile_rows)
    tile_rows = -(-rows // grid)
    tile_rows = ((tile_rows + 7) // 8) * 8
    rows = tile_rows * grid

    pad = rows * LANE - n
    if pad:
        p_flat = jnp.pad(p_flat, (0, pad))
        t_flat = jnp.pad(t_flat, (0, pad))
        w_flat = jnp.pad(w_flat, (0, pad))   # zero weight -> padding contributes 0

    return (p_flat.reshape(rows, LANE),
            t_flat.reshape(rows, LANE),
            w_flat.reshape(rows, LANE),
            tile_rows, grid)


def position_aware_wavelet_loss(pred_coeffs, target_coeffs):
    """pred_coeffs / target_coeffs: dict with 'a': (B, Sa) and 'd': list of 4 (B, Sj)."""
    p2d, t2d, w2d, tile_rows, grid = _prepare_slabs(pred_coeffs, target_coeffs)

    out = pl.pallas_call(
        _wsse_kernel,
        out_shape=jax.ShapeDtypeStruct((1, 1), jnp.float32),
        grid_spec=pltpu.PrefetchScalarGridSpec(
            num_scalar_prefetch=0,
            grid=(grid,),
            in_specs=[
                pl.BlockSpec((tile_rows, LANE), lambda i: (i, 0)),
                pl.BlockSpec((tile_rows, LANE), lambda i: (i, 0)),
                pl.BlockSpec((tile_rows, LANE), lambda i: (i, 0)),
            ],
            out_specs=pl.BlockSpec(memory_space=pltpu.SMEM),
            scratch_shapes=[pltpu.VMEM((8, LANE), jnp.float32)],
        ),
        compiler_params=pltpu.CompilerParams(
            dimension_semantics=("arbitrary",),   # running accumulator -> sequential
            vmem_limit_bytes=32 * 1024 * 1024,    # ample headroom on v5e/v6e/v7x
        ),
    )(p2d, t2d, w2d)
    return out[0, 0]


def _reference_loss(pred_coeffs, target_coeffs):
    """Pure-JAX reference mirroring the PyTorch forward, for sanity checking."""
    w = _level_weights()
    loss = w[0] * jnp.mean((pred_coeffs['a'] - target_coeffs['a']) ** 2)
    for j in range(LEVELS):
        se = (pred_coeffs['d'][j] - target_coeffs['d'][j]) ** 2
        S = se.shape[1]
        pos = jnp.linspace(0.0, 1.0, S)[None, :]
        if j == 0:
            pw = 1.0 + 4.0 * pos ** 2
        elif j == 1:
            pw = 5.0 - 4.0 * pos
        elif j == 2:
            pw = 7.0 - 6.0 * jnp.sqrt(pos)
        else:
            pw = jnp.ones_like(pos)
        loss = loss + w[j + 1] * jnp.mean(se * pw)
    return loss


if __name__ == "__main__":
    key = jax.random.PRNGKey(0)
    batch = 2
    # Shapes consistent with a 4-level DWT of a length-128 sequence.
    d_lens = [64, 32, 16, 8]
    a_len = 8

    keys = jax.random.split(key, 2 * (LEVELS + 1))
    pred = {
        'a': jax.random.normal(keys[0], (batch, a_len), dtype=jnp.float32),
        'd': [jax.random.normal(keys[1 + j], (batch, d_lens[j]), dtype=jnp.float32)
              for j in range(LEVELS)],
    }
    target = {
        'a': jax.random.normal(keys[5], (batch, a_len), dtype=jnp.float32),
        'd': [jax.random.normal(keys[6 + j], (batch, d_lens[j]), dtype=jnp.float32)
              for j in range(LEVELS)],
    }

    loss = position_aware_wavelet_loss(pred, target)
    loss = jax.block_until_ready(loss)

    ref = jax.block_until_ready(_reference_loss(pred, target))
    assert jnp.allclose(loss, ref, rtol=1e-4, atol=1e-5), (loss, ref)

    print("KERNEL_OK")
</pallas_src>

<mosaic_0001>
module attributes {stable_mosaic.version = 11 : i64} {
  func.func @_wsse_kernel(%arg0: i32, %arg1: memref<8x128xf32, #tpu.memory_space<vmem>>, %arg2: memref<8x128xf32, #tpu.memory_space<vmem>>, %arg3: memref<8x128xf32, #tpu.memory_space<vmem>>, %arg4: memref<1x1xf32, #tpu.memory_space<smem>>, %arg5: memref<8x128xf32, #tpu.memory_space<vmem>>) attributes {dimension_semantics = [#tpu.dimension_semantics<arbitrary>], iteration_bounds = array<i64: 1>, scalar_prefetch = 0 : i64, scratch_operands = 1 : i64, tpu.core_type = #tpu.core_type<tc>, window_params = [{transform_indices = @transform_0, window_bounds = array<i64: 8, 128>}, {transform_indices = @transform_1, window_bounds = array<i64: 8, 128>}, {transform_indices = @transform_2, window_bounds = array<i64: 8, 128>}, {transform_indices = @transform_3, window_bounds = array<i64: 1, 1>}]} {
    %c0_i32 = arith.constant 0 : i32
    %0 = arith.cmpi eq, %arg0, %c0_i32 : i32
    %1 = arith.extui %0 : i1 to i32
    %c0_i32_0 = arith.constant 0 : i32
    %2 = arith.cmpi ne, %1, %c0_i32_0 : i32
    scf.if %2 {
      %cst_12 = arith.constant 0.000000e+00 : f32
      %17 = vector.broadcast %cst_12 : f32 to vector<8x128xf32>
      %c0_13 = arith.constant 0 : index
      %c0_14 = arith.constant 0 : index
      %18 = vector.load %arg5[%c0_13, %c0_14] : memref<8x128xf32, #tpu.memory_space<vmem>>, vector<8x128xf32>
      tpu.vector_store %arg5[%c0_13, %c0_14], %17 {strides = array<i32>} : memref<8x128xf32, #tpu.memory_space<vmem>>, vector<8x128xf32>,
    } else {
    }
    %c0 = arith.constant 0 : index
    %c0_1 = arith.constant 0 : index
    %3 = vector.load %arg1[%c0, %c0_1] : memref<8x128xf32, #tpu.memory_space<vmem>>, vector<8x128xf32>
    %c0_2 = arith.constant 0 : index
    %c0_3 = arith.constant 0 : index
    %4 = vector.load %arg2[%c0_2, %c0_3] : memref<8x128xf32, #tpu.memory_space<vmem>>, vector<8x128xf32>
    %c0_4 = arith.constant 0 : index
    %c0_5 = arith.constant 0 : index
    %5 = vector.load %arg3[%c0_4, %c0_5] : memref<8x128xf32, #tpu.memory_space<vmem>>, vector<8x128xf32>
    %6 = arith.subf %3, %4 : vector<8x128xf32>
    %7 = arith.mulf %6, %6 : vector<8x128xf32>
    %8 = arith.mulf %7, %5 : vector<8x128xf32>
    %c0_6 = arith.constant 0 : index
    %c0_7 = arith.constant 0 : index
    %9 = vector.load %arg5[%c0_6, %c0_7] : memref<8x128xf32, #tpu.memory_space<vmem>>, vector<8x128xf32>
    %10 = vector.shape_cast %8 : vector<8x128xf32> to vector<1x8x128xf32>
    %cst = arith.constant dense<0.000000e+00> : vector<8x128xf32>
    %11 = vector.multi_reduction <add>, %10, %cst [0] : vector<1x8x128xf32> to vector<8x128xf32>
    %12 = arith.addf %9, %11 : vector<8x128xf32>
    %c0_8 = arith.constant 0 : index
    %c0_9 = arith.constant 0 : index
    %13 = vector.load %arg5[%c0_8, %c0_9] : memref<8x128xf32, #tpu.memory_space<vmem>>, vector<8x128xf32>
    tpu.vector_store %arg5[%c0_8, %c0_9], %12 {strides = array<i32>} : memref<8x128xf32, #tpu.memory_space<vmem>>, vector<8x128xf32>,
    %c0_i32_10 = arith.constant 0 : i32
    %14 = arith.cmpi eq, %arg0, %c0_i32_10 : i32
    %15 = arith.extui %14 : i1 to i32
    %c0_i32_11 = arith.constant 0 : i32
    %16 = arith.cmpi ne, %15, %c0_i32_11 : i32
    scf.if %16 {
      %c0_12 = arith.constant 0 : index
      %c0_13 = arith.constant 0 : index
      %17 = vector.load %arg5[%c0_12, %c0_13] : memref<8x128xf32, #tpu.memory_space<vmem>>, vector<8x128xf32>
      %18 = vector.shape_cast %17 : vector<8x128xf32> to vector<1x8x128xf32>
      %cst_14 = arith.constant dense<0.000000e+00> : vector<1xf32>
      %19 = vector.multi_reduction <add>, %18, %cst_14 [1, 2] : vector<1x8x128xf32> to vector<1xf32>
      %20 = vector.shape_cast %19 : vector<1xf32> to vector<1x1x1xf32>
      %21 = vector.extract %20[0, 0, 0] : f32 from vector<1x1x1xf32>
      %c0_15 = arith.constant 0 : index
      %c0_16 = arith.constant 0 : index
      %22 = memref.load %arg4[%c0_15, %c0_16] : memref<1x1xf32, #tpu.memory_space<smem>>
      memref.store %21, %arg4[%c0_15, %c0_16] : memref<1x1xf32, #tpu.memory_space<smem>>
    } else {
    }
    return
  }
  func.func @transform_0(%arg0: i32) -> (i32, i32) {
    %c0_i32 = arith.constant 0 : i32
    %c0_i32_0 = arith.constant 0 : i32
    return %arg0, %c0_i32 : i32, i32
  }
  func.func @transform_1(%arg0: i32) -> (i32, i32) {
    %c0_i32 = arith.constant 0 : i32
    %c0_i32_0 = arith.constant 0 : i32
    return %arg0, %c0_i32 : i32, i32
  }
  func.func @transform_2(%arg0: i32) -> (i32, i32) {
    %c0_i32 = arith.constant 0 : i32
    %c0_i32_0 = arith.constant 0 : i32
    return %arg0, %c0_i32 : i32, i32
  }
  func.func @transform_3(%arg0: i32) -> (i32, i32) {
    %c0_i32 = arith.constant 0 : i32
    %c0_i32_0 = arith.constant 0 : i32
    %c0_i32_1 = arith.constant 0 : i32
    return %c0_i32, %c0_i32_0 : i32, i32
  }
}

</mosaic_0001>

<llo_original>
// kernel: tpu_custom_call.1
$region0: #{tpu_custom_call.1}
  #allocation0 [shape = 'u32[]', space=smem, size = 0x4, offset = 0x4, fixed_abs, tag = 'smem constant byte address 0x4 - core index']
  #allocation1 [shape = 'u32[144,128]{1,0:T(1,128)}', space=vmem, size = 0x12000, scoped, tag = 'internal scratch']
  #allocation2 [shape = 'f32[8,128]{1,0:T(8,128)}', space=vmem, size = 0x1000, scoped, tag = 'scratch operand']
  %s0 = inlined_call_operand.hbm [shape: f32[8,128], index: 0, kind: input, shape index: {}]
  %s1 = inlined_call_operand.hbm [shape: f32[8,128], index: 1, kind: input, shape index: {}]
  %s2 = inlined_call_operand.hbm [shape: f32[8,128], index: 2, kind: input, shape index: {}]
  %s3 = inlined_call_operand.hbm [shape: f32[1,1], index: 3, kind: output, shape index: {}]
  %s4 = sld [smem:[#allocation0]]
  $region42: #{tpu_custom_call.1} parent=0
    _
  %s6 = ssub.s32 1, %s4
  %s7 = scalar_select 0, %s6, %s4
  $region1: #{tpu_custom_call.1} parent=0
    #allocation3 [shape = 'u8[4096]{0}', space=vmem, size = 0x1000, scoped, tag = 'input window, operand 0, single buffered']
    #allocation4 [shape = 's32[1]{0}', space=sflag, size = 0x4, scoped, tag = 'scoped memory for tpu_custom_call.1']
    #allocation5 [shape = 's32[1]{0}', space=sflag, size = 0x4, scoped, tag = 'scoped memory for tpu_custom_call.1']
    #allocation6 [shape = 'u8[4096]{0}', space=vmem, size = 0x1000, scoped, tag = 'input window, operand 1, single buffered']
    #allocation7 [shape = 's32[1]{0}', space=sflag, size = 0x4, scoped, tag = 'scoped memory for tpu_custom_call.1']
    #allocation8 [shape = 'u8[4096]{0}', space=vmem, size = 0x1000, scoped, tag = 'input window, operand 2, single buffered']
    #allocation9 [shape = 'u8[512]{0}', space=smem, size = 0x200, scoped, tag = 'output window, operand 0, single buffered']
    %8 = vsyncpa [#allocation4], 0
    %9 = vsyncpa [#allocation7], 0
    %10 = vsyncpa [#allocation5], 0
    // Predicated region
    $region2: #{tpu_custom_call.1} parent=1 // pred_check
      _
    $region3: #{tpu_custom_call.1} parent=1 // pred_check_branch
      %12 = sbr.rel (0) target = $region5
    $region4: #{tpu_custom_call.1} parent=1 // pred_region
      %s14 = ssub.s32 128, 128
      %15 = vsyncadd [#allocation4], %s14
      %s17 = sshll.u32 [#allocation3], 4
      %s18 = int_to_ptr.vmem [resolvable:$true] %s17
      %20 = dma.hbm_to_vmem [thread:$0]  %s0, 128, %s18, [#allocation4]
    $region5: #{tpu_custom_call.1} parent=1 // pred_fallthru
      _
    // Predicated region
    $region6: #{tpu_custom_call.1} parent=1 // pred_check
      _
    $region7: #{tpu_custom_call.1} parent=1 // pred_check_branch
      %22 = sbr.rel (0) target = $region9
    $region8: #{tpu_custom_call.1} parent=1 // pred_region
      %s24 = ssub.s32 128, 128
      %25 = vsyncadd [#allocation7], %s24
      %s27 = sshll.u32 [#allocation6], 4
      %s28 = int_to_ptr.vmem [resolvable:$true] %s27
      %30 = dma.hbm_to_vmem [thread:$0]  %s1, 128, %s28, [#allocation7]
    $region9: #{tpu_custom_call.1} parent=1 // pred_fallthru
      _
    // Predicated region
    $region10: #{tpu_custom_call.1} parent=1 // pred_check
      _
    $region11: #{tpu_custom_call.1} parent=1 // pred_check_branch
      %32 = sbr.rel (0) target = $region13
    $region12: #{tpu_custom_call.1} parent=1 // pred_region
      %s34 = ssub.s32 128, 128
      %35 = vsyncadd [#allocation7], %s34
      %s37 = sshll.u32 [#allocation8], 4
      %s38 = int_to_ptr.vmem [resolvable:$true] %s37
      %40 = dma.hbm_to_vmem [thread:$0]  %s2, 128, %s38, [#allocation7]
    $region13: #{tpu_custom_call.1} parent=1 // pred_fallthru
      _
    // Predicated region
    $region14: #{tpu_custom_call.1} parent=1 // pred_check
      _
    $region15: #{tpu_custom_call.1} parent=1 // pred_check_branch
      %42 = sbr.rel (0) target = $region17
    $region16: #{tpu_custom_call.1} parent=1 // pred_region
      %43 = dma.done [#allocation4], 128
    $region17: #{tpu_custom_call.1} parent=1 // pred_fallthru
      _
    // Predicated region
    $region18: #{tpu_custom_call.1} parent=1 // pred_check
      _
    $region19: #{tpu_custom_call.1} parent=1 // pred_check_branch
      %45 = sbr.rel (0) target = $region21
    $region20: #{tpu_custom_call.1} parent=1 // pred_region
      %46 = dma.done [#allocation7], 128
    $region21: #{tpu_custom_call.1} parent=1 // pred_fallthru
      _
    // Predicated region
    $region22: #{tpu_custom_call.1} parent=1 // pred_check
      _
    $region23: #{tpu_custom_call.1} parent=1 // pred_check_branch
      %48 = sbr.rel (0) target = $region25
    $region24: #{tpu_custom_call.1} parent=1 // pred_region
      %49 = dma.done [#allocation7], 128
    $region25: #{tpu_custom_call.1} parent=1 // pred_fallthru
      _
    %p50 = scmp.eq.s32.totalorder 0, 0
    // Predicated region
    $region26: #{tpu_custom_call.1} parent=1 // pred_check
      %p51 = pneg %p50
    $region27: #{tpu_custom_call.1} parent=1 // pred_check_branch
      %53 = sbr.rel (%p51) target = $region29
    $region28: #{tpu_custom_call.1} parent=1 // pred_region
      %54 = vst [vmem:[#allocation2] sm:$0xff] 0.0
    $region29: #{tpu_custom_call.1} parent=1 // pred_fallthru
      _
    %v55 = vld [vmem:[#allocation3] sm:$0xff]
    %v56 = vld [vmem:[#allocation6] sm:$0xff]
    %v57 = vld [vmem:[#allocation8] sm:$0xff]
    %v58 = vsub.f32 %v55, %v56
    %v59 = vmul.f32 %v58, %v58
    %v60 = vmul.f32 %v59, %v57
    %v61 = vld [vmem:[#allocation2] sm:$0xff]
    %v62 = vadd.f32 %v60, 0.0
    %v63 = vadd.f32 %v61, %v62
    %64 = vst [vmem:[#allocation2] sm:$0xff] %v63
    // Predicated region
    $region30: #{tpu_custom_call.1} parent=1 // pred_check
      %p65 = pneg %p50
    $region31: #{tpu_custom_call.1} parent=1 // pred_check_branch
      %67 = sbr.rel (%p65) target = $region33
    $region32: #{tpu_custom_call.1} parent=1 // pred_region
      %v68 = vld [vmem:[#allocation2] sm:$0xff]
      %69 = vadd.xlane.f32.xlu0 %v68
      %v70 = vpop.xlane.xlu0 %69
      %v71 = vrot.slane %v70, 4
      %v72 = vadd.f32 %v70, %v71
      %v73 = vrot.slane %v72, 2
      %v74 = vadd.f32 %v72, %v73
      %v75 = vrot.slane %v74, 1
      %v76 = vadd.f32 %v74, %v75
      %s77 = vtos %v76
      %s78 = scalar_lea.smem [#allocation9], 0
      %79 = sst [smem:[%s78]] %s77
    $region33: #{tpu_custom_call.1} parent=1 // pred_fallthru
      _
    // Predicated region
    $region34: #{tpu_custom_call.1} parent=1 // pred_check
      _
    $region35: #{tpu_custom_call.1} parent=1 // pred_check_branch
      %81 = sbr.rel (0) target = $region37
    $region36: #{tpu_custom_call.1} parent=1 // pred_region
      %s83 = ssub.s32 16, 16
      %84 = vsyncadd [#allocation5], %s83
      %87 = dma.smem_to_hbm [#allocation9], 16, %s3, [#allocation5]
    $region37: #{tpu_custom_call.1} parent=1 // pred_fallthru
      _
    // Predicated region
    $region38: #{tpu_custom_call.1} parent=1 // pred_check
      _
    $region39: #{tpu_custom_call.1} parent=1 // pred_check_branch
      %89 = sbr.rel (0) target = $region41
    $region40: #{tpu_custom_call.1} parent=1 // pred_region
      %90 = dma.done [#allocation5], 16
    $region41: #{tpu_custom_call.1} parent=1 // pred_fallthru
      _
    %91 = sfence
    %92 = vsyncpa [#allocation4], 1
    %93 = vsyncpa [#allocation7], 1
    %94 = vsyncpa [#allocation5], 1

</llo_original>
